<compile_context>
chip_gen: v7x
topology: tpu7x:2x2x1
jax: 0.10.0
libtpu: 0.0.40
codegen_flags: <defaults>
</compile_context>

<pallas_src>
import functools
import math

import jax
import jax.numpy as jnp
import numpy as np
from jax import lax
from jax.experimental import pallas as pl
from jax.experimental.pallas import tpu as pltpu

KERNEL_SIZE = 5  # deterministic module "parameter" (DecompositionLayer(kernel_size=5))


def _round_up(x, m):
    return ((x + m - 1) // m) * m


def _vmem_budget():
    """(target input-block bytes, vmem_limit_bytes) — generation aware, v7x-safe default."""
    target, limit = 2 << 20, 48 << 20            # safe for v7x (64 MiB VMEM per TC)
    try:
        cap = int(getattr(pltpu.get_tpu_info(), "vmem_capacity_bytes", 0))
        if cap >= (100 << 20):                   # v5e / v6e: 128 MiB physical VMEM
            target, limit = 6 << 20, 96 << 20
    except Exception:
        pass
    return target, limit


# ---------------------------------------------------------------------------
# Kernels
# ---------------------------------------------------------------------------

def _decomp_flat_kernel(x_ref, trend_ref, season_ref, *, kernel_size, L, C):
    """Lane-dense path. Block is (tb, W), W = round_up(L*C, 128); lanes [L*C, W) are pad."""
    tb, W = x_ref.shape
    pad = kernel_size // 2
    inv_k = 1.0 / float(kernel_size)

    xf = x_ref[...].astype(jnp.float32)
    pos = lax.broadcasted_iota(jnp.int32, (tb, W), 1)   # flattened (t, c) position

    acc = xf                                            # centre tap (d == 0)
    for d in range(-pad, pad + 1):
        if d == 0:
            continue
        s = (-d * C) % W                                # shifted[p] = xf[(p + d*C) % W]
        shifted = xf if s == 0 else pltpu.roll(xf, s, axis=1)
        # Validity of tap d depends only on the flattened position:
        #   d > 0: t + d < L  <=>  pos <  (L - d) * C
        #   d < 0: t + d >= 0 <=>  pos >= (-d) * C
        valid = (pos < (L - d) * C) if d > 0 else (pos >= (-d) * C)
        acc = acc + jnp.where(valid, shifted, 0.0)

    trend = acc * inv_k
    trend_ref[...] = trend.astype(trend_ref.dtype)
    season_ref[...] = (xf - trend).astype(season_ref.dtype)


def _decomp_rows_kernel(x_ref, t_ref, trend_ref, season_ref, *, kernel_size, L):
    """Channel-wide path. Block is (tb*L, C) whole batches; t_ref holds the time index."""
    R, _ = x_ref.shape
    pad = kernel_size // 2
    inv_k = 1.0 / float(kernel_size)

    xf = x_ref[...].astype(jnp.float32)
    t = t_ref[...]                                      # (R, 1) int32, broadcasts over lanes

    acc = xf                                            # centre tap (d == 0)
    for d in range(-pad, pad + 1):
        if d == 0:
            continue
        s = (-d) % R                                    # shifted[r] = xf[(r + d) % R]
        shifted = xf if s == 0 else pltpu.roll(xf, s, axis=0)
        valid = (t < L - d) if d > 0 else (t >= -d)     # AvgPool1d zero padding
        acc = acc + jnp.where(valid, shifted, 0.0)

    trend = acc * inv_k
    trend_ref[...] = trend.astype(trend_ref.dtype)
    season_ref[...] = (xf - trend).astype(season_ref.dtype)


# ---------------------------------------------------------------------------
# Tiling plan
# ---------------------------------------------------------------------------

def _plan(B, L, C, itemsize, target_bytes, vmem_limit):
    """Returns (use_flat, tb) — path selection and batches per block."""
    budget = vmem_limit // 2            # headroom for compiler slack / ragged padding
    dbuf = 6 * itemsize                 # (1 in + 2 out) x double buffering
    temps = 4 * 4                       # xf / acc / shifted / mask temporaries at f32 width

    def pick_tb(per_batch_in, per_batch_total):
        tb = min(B,
                 max(1, target_bytes // max(1, per_batch_in)),
                 max(1, budget // max(1, per_batch_total)))
        # >= 4 grid steps (2 per v7x TensorCore) whenever the batch allows it.
        if B >= 4:
            tb = min(tb, max(1, B // 4))
        # Prefer >= 8 steps if blocks would stay >= 1 MiB.
        if B >= 8 and (B // 8) * per_batch_in >= (1 << 20):
            tb = min(tb, B // 8)
        return max(1, tb)

    # Lane-dense flat path: one batch == one row of W = round_up(L*C, 128) lanes.
    W = _round_up(L * C, 128)
    flat_in = W * itemsize
    flat_total = W * (dbuf + temps)
    if C % 128 != 0 and min(B, 8) * flat_total <= budget:
        tb = pick_tb(flat_in, flat_total)
        if tb != B and tb % 8 != 0:                 # sublane block-dim rule: /8 or full dim
            tb = max(8, (tb // 8) * 8)
            if tb >= B:
                tb = B
        return True, tb

    # Rows path: (B*L, C) with full channel width per block.
    Cpad = _round_up(C, 128)
    rows_in = L * Cpad * itemsize
    rows_total = L * Cpad * (dbuf + temps)
    tb = pick_tb(rows_in, rows_total)
    if L % 8 != 0 and tb != B:                      # (tb*L) must be a multiple of 8
        m = 8 // math.gcd(L, 8)
        tb = (tb // m) * m
        if tb == 0:
            tb = B
    return False, tb


# ---------------------------------------------------------------------------
# Wrapper
# ---------------------------------------------------------------------------

def decomposition_layer(x, kernel_size=KERNEL_SIZE):
    """x: (B, L, C) float array. Returns (trend, seasonality), both (B, L, C)."""
    assert kernel_size % 2 == 1, "kernel_size must be odd so trend matches x's length"
    B, L, C = x.shape
    itemsize = jnp.dtype(x.dtype).itemsize
    target_bytes, vmem_limit = _vmem_budget()
    use_flat, tb = _plan(B, L, C, itemsize, target_bytes, vmem_limit)

    cost = pl.CostEstimate(
        flops=2 * kernel_size * B * L * C,           # window accumulate + scale/subtract
        transcendentals=0,
        bytes_accessed=3 * B * L * C * itemsize,     # read x, write trend + seasonality
    )
    cparams = pltpu.CompilerParams(
        dimension_semantics=("parallel",),
        vmem_limit_bytes=vmem_limit,
    )

    if use_flat:
        N = L * C
        W = _round_up(N, 128)
        x2 = x.reshape(B, N)                         # free row-major reshape
        out_sds = jax.ShapeDtypeStruct((B, N), x.dtype)
        blk = pl.BlockSpec((tb, W), lambda i: (i, 0))
        kern = functools.partial(_decomp_flat_kernel, kernel_size=kernel_size, L=L, C=C)
        trend2, season2 = pl.pallas_call(
            kern,
            out_shape=[out_sds, out_sds],
            grid=(pl.cdiv(B, tb),),
            in_specs=[blk],
            out_specs=[blk, blk],
            compiler_params=cparams,
            cost_estimate=cost,
        )(x2)
        return trend2.reshape(B, L, C), season2.reshape(B, L, C)

    # Rows path (C already a multiple of 128 -> lane-dense as-is).
    x2 = x.reshape(B * L, C)
    t_ids = jnp.tile(jnp.arange(L, dtype=jnp.int32), B).reshape(B * L, 1)
    out_sds = jax.ShapeDtypeStruct((B * L, C), x.dtype)
    rblk = tb * L
    x_blk = pl.BlockSpec((rblk, C), lambda i: (i, 0))
    t_blk = pl.BlockSpec((rblk, 1), lambda i: (i, 0))
    kern = functools.partial(_decomp_rows_kernel, kernel_size=kernel_size, L=L)
    trend2, season2 = pl.pallas_call(
        kern,
        out_shape=[out_sds, out_sds],
        grid=(pl.cdiv(B, tb),),
        in_specs=[x_blk, t_blk],
        out_specs=[x_blk, x_blk],
        compiler_params=cparams,
        cost_estimate=cost,
    )(x2, t_ids)
    return trend2.reshape(B, L, C), season2.reshape(B, L, C)


# ---------------------------------------------------------------------------
# Reference + checks
# ---------------------------------------------------------------------------

def _reference(x, kernel_size):
    # Pure-JAX reference reproducing AvgPool1d(count_include_pad=True) semantics.
    pad = kernel_size // 2
    xp = jnp.pad(x, ((0, 0), (pad, pad), (0, 0)))
    L = x.shape[1]
    trend = sum(xp[:, i:i + L, :] for i in range(kernel_size)) / kernel_size
    return trend, x - trend


def _check(x, kernel_size):
    trend, season = decomposition_layer(x, kernel_size)
    trend = jax.block_until_ready(trend)
    season = jax.block_until_ready(season)
    trend_ref, season_ref = _reference(x, kernel_size)
    np.testing.assert_allclose(np.asarray(trend), np.asarray(trend_ref), rtol=1e-5, atol=1e-5)
    np.testing.assert_allclose(np.asarray(season), np.asarray(season_ref), rtol=1e-5, atol=1e-5)


if __name__ == "__main__":
    key = jax.random.PRNGKey(0)
    k1, k2, k3, k4 = jax.random.split(key, 4)

    # Flat lane-dense path, single block (L*C already a multiple of 128).
    _check(jax.random.normal(k1, (2, 16, 32), dtype=jnp.float32), KERNEL_SIZE)
    # Flat path with lane padding (EDformer-style tiny channel count, L*C=112 -> W=128).
    _check(jax.random.normal(k2, (4, 16, 7), dtype=jnp.float32), KERNEL_SIZE)
    # Flat path, multi-step grid with a ragged last batch block.
    _check(jax.random.normal(k3, (20, 16, 7), dtype=jnp.float32), KERNEL_SIZE)
    # Rows path (C multiple of 128), multi-step grid, whole batches per block.
    _check(jax.random.normal(k4, (8, 24, 256), dtype=jnp.float32), KERNEL_SIZE)

    print("KERNEL_OK")
</pallas_src>

<mosaic_0001>
module attributes {stable_mosaic.version = 11 : i64} {
  func.func @_decomp_flat_kernel(%arg0: i32, %arg1: memref<2x512xf32, #tpu.memory_space<vmem>>, %arg2: memref<2x512xf32, #tpu.memory_space<vmem>>, %arg3: memref<2x512xf32, #tpu.memory_space<vmem>>) attributes {dimension_semantics = [#tpu.dimension_semantics<parallel>], iteration_bounds = array<i64: 1>, scalar_prefetch = 0 : i64, scratch_operands = 0 : i64, tpu.core_type = #tpu.core_type<tc>, window_params = [{transform_indices = @transform_0, window_bounds = array<i64: 2, 512>}, {transform_indices = @transform_1, window_bounds = array<i64: 2, 512>}, {transform_indices = @transform_2, window_bounds = array<i64: 2, 512>}]} {
    %c0 = arith.constant 0 : index
    %c0_0 = arith.constant 0 : index
    %0 = vector.load %arg1[%c0, %c0_0] : memref<2x512xf32, #tpu.memory_space<vmem>>, vector<2x512xf32>
    %1 = tpu.iota {dimensions = array<i32: 1>} : vector<2x512xi32>
    %c64_i32 = arith.constant 64 : i32
    %2 = tpu.dynamic_rotate %0 by %c64_i32 dim 1 : vector<2x512xf32>, i32 -> vector<2x512xf32>
    %c64_i32_1 = arith.constant 64 : i32
    %3 = vector.broadcast %c64_i32_1 : i32 to vector<2x512xi32>
    %4 = arith.cmpi sge, %1, %3 : vector<2x512xi32>
    %cst = arith.constant 0.000000e+00 : f32
    %5 = vector.broadcast %cst : f32 to vector<2x512xf32>
    %6 = arith.select %4, %2, %5 : vector<2x512xi1>, vector<2x512xf32>
    %7 = arith.addf %0, %6 : vector<2x512xf32>
    %c32_i32 = arith.constant 32 : i32
    %8 = tpu.dynamic_rotate %0 by %c32_i32 dim 1 : vector<2x512xf32>, i32 -> vector<2x512xf32>
    %c32_i32_2 = arith.constant 32 : i32
    %9 = vector.broadcast %c32_i32_2 : i32 to vector<2x512xi32>
    %10 = arith.cmpi sge, %1, %9 : vector<2x512xi32>
    %cst_3 = arith.constant 0.000000e+00 : f32
    %11 = vector.broadcast %cst_3 : f32 to vector<2x512xf32>
    %12 = arith.select %10, %8, %11 : vector<2x512xi1>, vector<2x512xf32>
    %13 = arith.addf %7, %12 : vector<2x512xf32>
    %c480_i32 = arith.constant 480 : i32
    %14 = tpu.dynamic_rotate %0 by %c480_i32 dim 1 : vector<2x512xf32>, i32 -> vector<2x512xf32>
    %c480_i32_4 = arith.constant 480 : i32
    %15 = vector.broadcast %c480_i32_4 : i32 to vector<2x512xi32>
    %16 = arith.cmpi slt, %1, %15 : vector<2x512xi32>
    %cst_5 = arith.constant 0.000000e+00 : f32
    %17 = vector.broadcast %cst_5 : f32 to vector<2x512xf32>
    %18 = arith.select %16, %14, %17 : vector<2x512xi1>, vector<2x512xf32>
    %19 = arith.addf %13, %18 : vector<2x512xf32>
    %c448_i32 = arith.constant 448 : i32
    %20 = tpu.dynamic_rotate %0 by %c448_i32 dim 1 : vector<2x512xf32>, i32 -> vector<2x512xf32>
    %c448_i32_6 = arith.constant 448 : i32
    %21 = vector.broadcast %c448_i32_6 : i32 to vector<2x512xi32>
    %22 = arith.cmpi slt, %1, %21 : vector<2x512xi32>
    %cst_7 = arith.constant 0.000000e+00 : f32
    %23 = vector.broadcast %cst_7 : f32 to vector<2x512xf32>
    %24 = arith.select %22, %20, %23 : vector<2x512xi1>, vector<2x512xf32>
    %25 = arith.addf %19, %24 : vector<2x512xf32>
    %cst_8 = arith.constant 2.000000e-01 : f32
    %26 = vector.broadcast %cst_8 : f32 to vector<2x512xf32>
    %27 = arith.mulf %25, %26 : vector<2x512xf32>
    %c0_9 = arith.constant 0 : index
    %c0_10 = arith.constant 0 : index
    %28 = vector.load %arg2[%c0_9, %c0_10] : memref<2x512xf32, #tpu.memory_space<vmem>>, vector<2x512xf32>
    tpu.vector_store %arg2[%c0_9, %c0_10], %27 {strides = array<i32>} : memref<2x512xf32, #tpu.memory_space<vmem>>, vector<2x512xf32>,
    %29 = arith.subf %0, %27 : vector<2x512xf32>
    %c0_11 = arith.constant 0 : index
    %c0_12 = arith.constant 0 : index
    %30 = vector.load %arg3[%c0_11, %c0_12] : memref<2x512xf32, #tpu.memory_space<vmem>>, vector<2x512xf32>
    tpu.vector_store %arg3[%c0_11, %c0_12], %29 {strides = array<i32>} : memref<2x512xf32, #tpu.memory_space<vmem>>, vector<2x512xf32>,
    return
  }
  func.func @transform_0(%arg0: i32) -> (i32, i32) {
    %c0_i32 = arith.constant 0 : i32
    %c0_i32_0 = arith.constant 0 : i32
    return %arg0, %c0_i32 : i32, i32
  }
  func.func @transform_1(%arg0: i32) -> (i32, i32) {
    %c0_i32 = arith.constant 0 : i32
    %c0_i32_0 = arith.constant 0 : i32
    return %arg0, %c0_i32 : i32, i32
  }
  func.func @transform_2(%arg0: i32) -> (i32, i32) {
    %c0_i32 = arith.constant 0 : i32
    %c0_i32_0 = arith.constant 0 : i32
    return %arg0, %c0_i32 : i32, i32
  }
}

</mosaic_0001>

<llo_original>
// kernel: tpu_custom_call.1
$region0: #{tpu_custom_call.1}
  #allocation0 [shape = 'u32[]', space=smem, size = 0x4, offset = 0x4, fixed_abs, tag = 'smem constant byte address 0x4 - core index']
  #allocation1 [shape = 'u32[144,128]{1,0:T(1,128)}', space=vmem, size = 0x12000, scoped, tag = 'internal scratch']
  %s0 = inlined_call_operand.hbm [shape: f32[2,512], index: 0, kind: input, shape index: {}]
  %s1 = inlined_call_operand.hbm [shape: f32[2,512], index: 1, kind: output, shape index: {0}]
  %s2 = inlined_call_operand.hbm [shape: f32[2,512], index: 2, kind: output, shape index: {1}]
  %3 = xla_tuple %s1, %s2
  %s4 = sld [smem:[#allocation0]]
  $region26: #{tpu_custom_call.1} parent=0
    _
  %s6 = ssub.s32 1, %s4
  %s7 = scalar_select 0, %s6, %s4
  $region1: #{tpu_custom_call.1} parent=0
    #allocation2 [shape = 'u8[4096]{0}', space=vmem, size = 0x1000, scoped, tag = 'input window, operand 0, single buffered']
    #allocation3 [shape = 's32[1]{0}', space=sflag, size = 0x4, scoped, tag = 'scoped memory for tpu_custom_call.1']
    #allocation4 [shape = 's32[1]{0}', space=sflag, size = 0x4, scoped, tag = 'scoped memory for tpu_custom_call.1']
    #allocation5 [shape = 'u8[4096]{0}', space=vmem, size = 0x1000, scoped, tag = 'output window, operand 0, single buffered']
    #allocation6 [shape = 'u8[4096]{0}', space=vmem, size = 0x1000, scoped, tag = 'output window, operand 1, single buffered']
    #allocation7 [shape = 's32[1]{0}', space=sflag, size = 0x4, scoped, tag = 'scoped memory for tpu_custom_call.1']
    %8 = vsyncpa [#allocation3], 0
    %9 = vsyncpa [#allocation4], 0
    %10 = vsyncpa [#allocation7], 0
    // Predicated region
    $region2: #{tpu_custom_call.1} parent=1 // pred_check
      _
    $region3: #{tpu_custom_call.1} parent=1 // pred_check_branch
      %12 = sbr.rel (0) target = $region5
    $region4: #{tpu_custom_call.1} parent=1 // pred_region
      %s14 = ssub.s32 128, 128
      %15 = vsyncadd [#allocation3], %s14
      %s17 = sshll.u32 [#allocation2], 4
      %s18 = int_to_ptr.vmem [resolvable:$true] %s17
      %20 = dma.hbm_to_vmem [thread:$0]  %s0, 128, %s18, [#allocation3]
    $region5: #{tpu_custom_call.1} parent=1 // pred_fallthru
      _
    // Predicated region
    $region6: #{tpu_custom_call.1} parent=1 // pred_check
      _
    $region7: #{tpu_custom_call.1} parent=1 // pred_check_branch
      %22 = sbr.rel (0) target = $region9
    $region8: #{tpu_custom_call.1} parent=1 // pred_region
      %23 = dma.done [#allocation3], 128
    $region9: #{tpu_custom_call.1} parent=1 // pred_fallthru
      _
    %v24 = vld [vmem:[#allocation2] sm:$0xff]
    %v25 = vlaneseq
    %v26 = vand.u32 %v25, 127
    %v27 = vadd.s32 %v26, 128
    %v28 = vadd.s32 %v26, 256
    %v29 = vadd.s32 %v26, 384
    %v31 = vcombine.high %v24, %v24
    %v33 = vunpack.c.l.s4 1983009808
    %v34 = vunpack.c.0.s8 %v33
    %v35 = vlaneseq
    %v36 = vshrl.u32 %v35, 7
    %v37 = vsub.s32 %v34, %v36
    %v38 = vrot.slane %v24, %v37
    %v40 = vunpack.c.l.s4 1983009808
    %v41 = vunpack.c.0.s8 %v40
    %v42 = vlaneseq
    %v43 = vshrl.u32 %v42, 7
    %v44 = vsub.s32 %v41, %v43
    %v45 = vrot.slane %v31, %v44
    %v46 = vcombine.high %v38, %v38
    %v47 = vcombine.high %v45, %v45
    %52 = vrot.lane.b32.xlu0 %v38, 64
    %v53 = vpop.permute.xlu0 %52
    %54 = vrot.lane.b32.xlu0 %v46, 64
    %v55 = vpop.permute.xlu0 %54
    %56 = vrot.lane.b32.xlu0 %v45, 64
    %v57 = vpop.permute.xlu0 %56
    %58 = vrot.lane.b32.xlu0 %v47, 64
    %v59 = vpop.permute.xlu0 %58
    %vm60 = vcmp.lt.s32.totalorder %v26, 64
    %v61 = vsel %vm60, %v57, %v59
    %v62 = vsel %vm60, %v55, %v57
    %v63 = vsel %vm60, %v53, %v55
    %v64 = vsel %vm60, %v59, %v53
    %vm65 = vcmp.ge.s32.totalorder %v26, 64
    %vm66 = vcmp.ge.s32.totalorder %v27, 64
    %vm67 = vcmp.ge.s32.totalorder %v28, 64
    %vm68 = vcmp.ge.s32.totalorder %v29, 64
    %v69 = vsel %vm65, %v64, 0.0
    %v70 = vsel %vm66, %v63, 0.0
    %v71 = vsel %vm67, %v62, 0.0
    %v72 = vsel %vm68, %v61, 0.0
    %v77 = vcombine.low %v69, %v70
    %v78 = vcombine.low %v71, %v72
    %v80 = vunpack.c.l.s4 1983009808
    %v81 = vunpack.c.0.s8 %v80
    %v82 = vlaneseq
    %v83 = vshrl.u32 %v82, 7
    %v84 = vsub.s32 %v81, %v83
    %v85 = vrot.slane %v77, %v84
    %v87 = vunpack.c.l.s4 1983009808
    %v88 = vunpack.c.0.s8 %v87
    %v89 = vlaneseq
    %v90 = vshrl.u32 %v89, 7
    %v91 = vsub.s32 %v88, %v90
    %v92 = vrot.slane %v78, %v91
    %v93 = vcombine.low %v85, %v92
    %v95 = vadd.f32 %v24, %v93
    %96 = vrot.lane.b32.xlu0 %v38, 32
    %v97 = vpop.permute.xlu0 %96
    %98 = vrot.lane.b32.xlu0 %v46, 32
    %v99 = vpop.permute.xlu0 %98
    %100 = vrot.lane.b32.xlu0 %v45, 32
    %v101 = vpop.permute.xlu0 %100
    %102 = vrot.lane.b32.xlu0 %v47, 32
    %v103 = vpop.permute.xlu0 %102
    %vm104 = vcmp.lt.s32.totalorder %v26, 32
    %v105 = vsel %vm104, %v101, %v103
    %v106 = vsel %vm104, %v99, %v101
    %v107 = vsel %vm104, %v97, %v99
    %v108 = vsel %vm104, %v103, %v97
    %vm109 = vcmp.ge.s32.totalorder %v26, 32
    %vm110 = vcmp.ge.s32.totalorder %v27, 32
    %vm111 = vcmp.ge.s32.totalorder %v28, 32
    %vm112 = vcmp.ge.s32.totalorder %v29, 32
    %v113 = vsel %vm109, %v108, 0.0
    %v114 = vsel %vm110, %v107, 0.0
    %v115 = vsel %vm111, %v106, 0.0
    %v116 = vsel %vm112, %v105, 0.0
    %v121 = vcombine.low %v113, %v114
    %v122 = vcombine.low %v115, %v116
    %v124 = vunpack.c.l.s4 1983009808
    %v125 = vunpack.c.0.s8 %v124
    %v126 = vlaneseq
    %v127 = vshrl.u32 %v126, 7
    %v128 = vsub.s32 %v125, %v127
    %v129 = vrot.slane %v121, %v128
    %v131 = vunpack.c.l.s4 1983009808
    %v132 = vunpack.c.0.s8 %v131
    %v133 = vlaneseq
    %v134 = vshrl.u32 %v133, 7
    %v135 = vsub.s32 %v132, %v134
    %v136 = vrot.slane %v122, %v135
    %v137 = vcombine.low %v129, %v136
    %v139 = vadd.f32 %v95, %v137
    %140 = vrot.lane.b32.xlu0 %v38, 96
    %v141 = vpop.permute.xlu0 %140
    %142 = vrot.lane.b32.xlu0 %v46, 96
    %v143 = vpop.permute.xlu0 %142
    %144 = vrot.lane.b32.xlu0 %v45, 96
    %v145 = vpop.permute.xlu0 %144
    %146 = vrot.lane.b32.xlu0 %v47, 96
    %v147 = vpop.permute.xlu0 %146
    %vm148 = vcmp.lt.s32.totalorder %v26, 96
    %v149 = vsel %vm148, %v145, %v147
    %v150 = vsel %vm148, %v143, %v145
    %v151 = vsel %vm148, %v141, %v143
    %v152 = vsel %vm148, %v147, %v141
    %vm153 = vcmp.lt.s32.totalorder %v26, 480
    %vm154 = vcmp.lt.s32.totalorder %v27, 480
    %vm155 = vcmp.lt.s32.totalorder %v28, 480
    %vm156 = vcmp.lt.s32.totalorder %v29, 480
    %v157 = vsel %vm153, %v151, 0.0
    %v158 = vsel %vm154, %v150, 0.0
    %v159 = vsel %vm155, %v149, 0.0
    %v160 = vsel %vm156, %v152, 0.0
    %v165 = vcombine.low %v157, %v158
    %v166 = vcombine.low %v159, %v160
    %v168 = vunpack.c.l.s4 1983009808
    %v169 = vunpack.c.0.s8 %v168
    %v170 = vlaneseq
    %v171 = vshrl.u32 %v170, 7
    %v172 = vsub.s32 %v169, %v171
    %v173 = vrot.slane %v165, %v172
    %v175 = vunpack.c.l.s4 1983009808
    %v176 = vunpack.c.0.s8 %v175
    %v177 = vlaneseq
    %v178 = vshrl.u32 %v177, 7
    %v179 = vsub.s32 %v176, %v178
    %v180 = vrot.slane %v166, %v179
    %v181 = vcombine.low %v173, %v180
    %v183 = vadd.f32 %v139, %v181
    %vm184 = vcmp.lt.s32.totalorder %v26, 448
    %vm185 = vcmp.lt.s32.totalorder %v27, 448
    %vm186 = vcmp.lt.s32.totalorder %v28, 448
    %vm187 = vcmp.lt.s32.totalorder %v29, 448
    %v188 = vsel %vm184, %v63, 0.0
    %v189 = vsel %vm185, %v62, 0.0
    %v190 = vsel %vm186, %v61, 0.0
    %v191 = vsel %vm187, %v64, 0.0
    %v196 = vcombine.low %v188, %v189
    %v197 = vcombine.low %v190, %v191
    %v199 = vunpack.c.l.s4 1983009808
    %v200 = vunpack.c.0.s8 %v199
    %v201 = vlaneseq
    %v202 = vshrl.u32 %v201, 7
    %v203 = vsub.s32 %v200, %v202
    %v204 = vrot.slane %v196, %v203
    %v206 = vunpack.c.l.s4 1983009808
    %v207 = vunpack.c.0.s8 %v206
    %v208 = vlaneseq
    %v209 = vshrl.u32 %v208, 7
    %v210 = vsub.s32 %v207, %v209
    %v211 = vrot.slane %v197, %v210
    %v212 = vcombine.low %v204, %v211
    %v214 = vadd.f32 %v183, %v212
    %v215 = vmul.f32 %v214, 0.2
    %216 = vst [vmem:[#allocation5] sm:$0xff] %v215
    %v217 = vsub.f32 %v24, %v215
    %218 = vst [vmem:[#allocation6] sm:$0xff] %v217
    // Predicated region
    $region10: #{tpu_custom_call.1} parent=1 // pred_check
      _
    $region11: #{tpu_custom_call.1} parent=1 // pred_check_branch
      %220 = sbr.rel (0) target = $region13
    $region12: #{tpu_custom_call.1} parent=1 // pred_region
      %s222 = ssub.s32 128, 128
      %223 = vsyncadd [#allocation4], %s222
      %s225 = sshll.u32 [#allocation5], 4
      %s226 = int_to_ptr.vmem [resolvable:$true] %s225
      %228 = dma.vmem_to_hbm [thread:$0]  %s226, 128, %s1, [#allocation4]
    $region13: #{tpu_custom_call.1} parent=1 // pred_fallthru
      _
    // Predicated region
    $region14: #{tpu_custom_call.1} parent=1 // pred_check
      _
    $region15: #{tpu_custom_call.1} parent=1 // pred_check_branch
      %230 = sbr.rel (0) target = $region17
    $region16: #{tpu_custom_call.1} parent=1 // pred_region
      %s232 = ssub.s32 128, 128
      %233 = vsyncadd [#allocation7], %s232
      %s235 = sshll.u32 [#allocation6], 4
      %s236 = int_to_ptr.vmem [resolvable:$true] %s235
      %238 = dma.vmem_to_hbm [thread:$0]  %s236, 128, %s2, [#allocation7]
    $region17: #{tpu_custom_call.1} parent=1 // pred_fallthru
      _
    // Predicated region
    $region18: #{tpu_custom_call.1} parent=1 // pred_check
      _
    $region19: #{tpu_custom_call.1} parent=1 // pred_check_branch
      %240 = sbr.rel (0) target = $region21
    $region20: #{tpu_custom_call.1} parent=1 // pred_region
      %241 = dma.done [#allocation4], 128
    $region21: #{tpu_custom_call.1} parent=1 // pred_fallthru
      _
    // Predicated region
    $region22: #{tpu_custom_call.1} parent=1 // pred_check
      _
    $region23: #{tpu_custom_call.1} parent=1 // pred_check_branch
      %243 = sbr.rel (0) target = $region25
    $region24: #{tpu_custom_call.1} parent=1 // pred_region
      %244 = dma.done [#allocation7], 128
    $region25: #{tpu_custom_call.1} parent=1 // pred_fallthru
      _
    %245 = vsyncpa [#allocation3], 1
    %246 = vsyncpa [#allocation4], 1
    %247 = vsyncpa [#allocation7], 1

</llo_original>
